<compile_context>
chip_gen: v5e
topology: v5e:2x2
jax: 0.10.0
libtpu: 0.0.40
codegen_flags: <defaults>
</compile_context>

<pallas_src>
import math

import jax
import jax.numpy as jnp
from jax.experimental import pallas as pl
from jax.experimental.pallas import tpu as pltpu

# Model hyper-parameters (small MLP VAE, consistent with the module's __init__).
INPUT_DIM = 128
HIDDEN_DIMS = [64, 32]
LATENT_DIM = 16

PAD = 128                      # lane-dense padded width for every layer
NUM_W = 7                      # ew0, ew1, wmu, wlv, dw0, dw1, wrec
SLAB_ROWS = NUM_W * PAD + 8    # 7 padded weights + one 8-row bias block

_LOG_2PI = math.log(2.0 * math.pi)


def _vae_kernel(x_ref, eps_ref, p_ref, xmu_ref, kl_ref):
    f32 = jnp.float32

    def w(i):
        # Padded (PAD, PAD) weight block i; static, 128-aligned slice -> zero cost.
        return p_ref[pl.ds(i * PAD, PAD), :]

    b = p_ref[pl.ds(NUM_W * PAD, 8), :]          # (8, PAD): one bias per row

    # ---------------- Encoder (padded lanes stay exactly 0 through ReLU) ------
    h = x_ref[...]
    h = jnp.maximum(jnp.dot(h, w(0), preferred_element_type=f32) + b[0:1, :], 0.0)
    h = jnp.maximum(jnp.dot(h, w(1), preferred_element_type=f32) + b[1:2, :], 0.0)

    # mu / log_var heads.  Padded lanes of both are exactly 0 (zero weight
    # columns, zero bias), which makes every padded-lane KL term exactly 0.
    mu = jnp.dot(h, w(2), preferred_element_type=f32) + b[2:3, :]
    log_var = jnp.dot(h, w(3), preferred_element_type=f32) + b[3:4, :]

    # -------- Reparametrization trick: z = mu + exp(0.5*log_var) * eps --------
    eps = eps_ref[...]                # zero-padded beyond LATENT_DIM
    std = jnp.exp(0.5 * log_var)      # single EUP exp
    var = std * std                   # == exp(log_var), reused below
    z = mu + std * eps

    # -------- Sampled KL: log q(z|x) - log p(z) -------------------------------
    # qz - pz = sum(-0.5*log_var - (z-mu)^2/(2*var) + 0.5*z^2); the log(2*pi)
    # constants cancel and (z-mu)^2/(2*var) == 0.5*eps^2 exactly.
    # Padded lanes: mu = log_var = eps = 0 -> z = 0 -> term = 0.
    kl_sampled = jnp.sum(0.5 * (z * z - eps * eps) - 0.5 * log_var,
                         axis=-1, keepdims=True)

    # -------- Analytical KL: 0.5 * sum(log_var + 1 - mu^2 - exp(log_var)) -----
    # Padded lanes: 0.5*(0 + 1 - 0 - 1) = 0.
    kl_analytic = 0.5 * jnp.sum(log_var + 1.0 - mu * mu - var,
                                axis=-1, keepdims=True)

    kl_ref[:, 0:1] = kl_sampled
    kl_ref[:, 1:2] = kl_analytic

    # ---------------- Decoder --------------------------------------------------
    d = jnp.maximum(jnp.dot(z, w(4), preferred_element_type=f32) + b[4:5, :], 0.0)
    d = jnp.maximum(jnp.dot(d, w(5), preferred_element_type=f32) + b[5:6, :], 0.0)
    logits = jnp.dot(d, w(6), preferred_element_type=f32) + b[6:7, :]
    xmu_ref[...] = jax.nn.sigmoid(logits)


def _round_up(n, m):
    return ((n + m - 1) // m) * m


def vae_forward(x, eps, param_slab):
    """Full VAE forward in one pallas_call.

    Returns (x_mu, kl_divergence, kl_analytical), matching the PyTorch module
    (the KLs are stored as attributes in torch; returned explicitly here).
    """
    batch = x.shape[0]
    tile_b = min(128, _round_up(batch, 8))       # 128-row MXU tiles for big batches
    b_pad = _round_up(batch, tile_b)

    x_p = jnp.zeros((b_pad, PAD), jnp.float32).at[:batch, :INPUT_DIM].set(x)
    eps_p = jnp.zeros((b_pad, PAD), jnp.float32).at[:batch, :LATENT_DIM].set(eps)

    x_mu, kl = pl.pallas_call(
        _vae_kernel,
        out_shape=(
            jax.ShapeDtypeStruct((b_pad, PAD), jnp.float32),   # x_mu (lane-dense)
            jax.ShapeDtypeStruct((b_pad, 2), jnp.float32),     # [kl_sampled, kl_analytic]
        ),
        grid=(b_pad // tile_b,),
        in_specs=[
            pl.BlockSpec((tile_b, PAD), lambda i: (i, 0)),          # x tile
            pl.BlockSpec((tile_b, PAD), lambda i: (i, 0)),          # eps tile
            pl.BlockSpec((SLAB_ROWS, PAD), lambda i: (0, 0)),       # resident param slab
        ],
        out_specs=(
            pl.BlockSpec((tile_b, PAD), lambda i: (i, 0)),
            pl.BlockSpec((tile_b, 2), lambda i: (i, 0)),
        ),
        compiler_params=pltpu.CompilerParams(
            dimension_semantics=("parallel",)),   # shards batch tiles across v7x's 2 TCs
    )(x_p, eps_p, param_slab)

    return x_mu[:batch, :INPUT_DIM], kl[:batch, 0], kl[:batch, 1]


# ----------------------------- parameters -----------------------------------


def _xavier_normal(key, fan_in, fan_out):
    # torch.nn.init.xavier_normal_: std = sqrt(2 / (fan_in + fan_out)).
    # Returned directly in (in, out) layout (already transposed vs torch).
    std = math.sqrt(2.0 / (fan_in + fan_out))
    return std * jax.random.normal(key, (fan_in, fan_out), dtype=jnp.float32)


def init_params(key):
    """Xavier-normal weights, zero biases; returns the 14 unpadded arrays."""
    params = []

    def linear(k, fan_in, fan_out):
        return _xavier_normal(k, fan_in, fan_out), jnp.zeros((fan_out,), jnp.float32)

    keys = iter(jax.random.split(key, 7))

    enc_dims = [INPUT_DIM] + HIDDEN_DIMS
    for i in range(1, len(enc_dims)):
        params.extend(linear(next(keys), enc_dims[i - 1], enc_dims[i]))
    params.extend(linear(next(keys), HIDDEN_DIMS[-1], LATENT_DIM))   # mu head
    params.extend(linear(next(keys), HIDDEN_DIMS[-1], LATENT_DIM))   # log_var head

    dec_hidden = list(reversed(HIDDEN_DIMS))
    dec_dims = [LATENT_DIM] + dec_hidden
    for i in range(1, len(dec_dims)):
        params.extend(linear(next(keys), dec_dims[i - 1], dec_dims[i]))
    params.extend(linear(next(keys), dec_hidden[-1], INPUT_DIM))     # reconstruction
    return params


def pack_params(params):
    """Packs all weights/biases into one (SLAB_ROWS, 128) zero-padded f32 slab."""
    (ew0, eb0, ew1, eb1, wmu, bmu, wlv, blv,
     dw0, db0, dw1, db1, wrec, brec) = params

    def pad_w(wm):
        fi, fo = wm.shape
        return jnp.zeros((PAD, PAD), jnp.float32).at[:fi, :fo].set(wm)

    def pad_b(bv):
        return jnp.zeros((PAD,), jnp.float32).at[:bv.shape[0]].set(bv)

    w_blocks = [pad_w(wm) for wm in (ew0, ew1, wmu, wlv, dw0, dw1, wrec)]
    b_rows = [pad_b(bv) for bv in (eb0, eb1, bmu, blv, db0, db1, brec)]
    b_rows.append(jnp.zeros((PAD,), jnp.float32))        # pad bias block to 8 rows
    slab = jnp.concatenate(w_blocks + [jnp.stack(b_rows, axis=0)], axis=0)
    assert slab.shape == (SLAB_ROWS, PAD)
    return slab


# ----------------------------- reference ------------------------------------


def _reference_forward(x, eps, params):
    """Pure-JAX reference mirroring the PyTorch math (unsimplified KL)."""
    (ew0, eb0, ew1, eb1, wmu, bmu, wlv, blv,
     dw0, db0, dw1, db1, wrec, brec) = params
    h = jnp.maximum(x @ ew0 + eb0, 0.0)
    h = jnp.maximum(h @ ew1 + eb1, 0.0)
    mu = h @ wmu + bmu
    log_var = h @ wlv + blv
    z = mu + jnp.exp(0.5 * log_var) * eps
    qz = jnp.sum(-0.5 * _LOG_2PI - 0.5 * log_var
                 - (z - mu) ** 2 / (2.0 * jnp.exp(log_var)), axis=-1)
    pz = jnp.sum(-0.5 * _LOG_2PI - 0.5 * z * z, axis=-1)
    kl = qz - pz
    kla = 0.5 * jnp.sum(log_var + 1.0 - mu * mu - jnp.exp(log_var), axis=-1)
    d = jnp.maximum(z @ dw0 + db0, 0.0)
    d = jnp.maximum(d @ dw1 + db1, 0.0)
    x_mu = jax.nn.sigmoid(d @ wrec + brec)
    return x_mu, kl, kla


if __name__ == "__main__":
    key = jax.random.PRNGKey(0)
    k_param, k_x, k_eps = jax.random.split(key, 3)

    params = init_params(k_param)
    slab = pack_params(params)

    BATCH = 8
    x = jax.random.normal(k_x, (BATCH, INPUT_DIM), dtype=jnp.float32)
    # The torch module samples eps internally (torch.randn_like); here the noise
    # is drawn deterministically outside and fed to the kernel.
    eps = jax.random.normal(k_eps, (BATCH, LATENT_DIM), dtype=jnp.float32)

    x_mu, kl, kla = vae_forward(x, eps, slab)
    jax.block_until_ready((x_mu, kl, kla))

    ref_x_mu, ref_kl, ref_kla = _reference_forward(x, eps, params)
    assert jnp.allclose(x_mu, ref_x_mu, atol=1e-5, rtol=1e-5)
    assert jnp.allclose(kl, ref_kl, atol=5e-4, rtol=1e-4)
    assert jnp.allclose(kla, ref_kla, atol=5e-4, rtol=1e-4)

    print("KERNEL_OK")
</pallas_src>

<mosaic_0001>
module attributes {stable_mosaic.version = 11 : i64} {
  func.func @_vae_kernel(%arg0: i32, %arg1: memref<8x128xf32, #tpu.memory_space<vmem>>, %arg2: memref<8x128xf32, #tpu.memory_space<vmem>>, %arg3: memref<904x128xf32, #tpu.memory_space<vmem>>, %arg4: memref<8x128xf32, #tpu.memory_space<vmem>>, %arg5: memref<8x2xf32, #tpu.memory_space<vmem>>) attributes {dimension_semantics = [#tpu.dimension_semantics<parallel>], iteration_bounds = array<i64: 1>, scalar_prefetch = 0 : i64, scratch_operands = 0 : i64, tpu.core_type = #tpu.core_type<tc>, window_params = [{transform_indices = @transform_0, window_bounds = array<i64: 8, 128>}, {transform_indices = @transform_1, window_bounds = array<i64: 8, 128>}, {pipeline_mode = #tpu.pipeline_mode<synchronous>, transform_indices = @transform_2, window_bounds = array<i64: 904, 128>}, {transform_indices = @transform_3, window_bounds = array<i64: 8, 128>}, {transform_indices = @transform_4, window_bounds = array<i64: 8, 2>}]} {
    %c896 = arith.constant 896 : index
    %c0 = arith.constant 0 : index
    %0 = vector.load %arg3[%c896, %c0] : memref<904x128xf32, #tpu.memory_space<vmem>>, vector<8x128xf32>
    %c0_0 = arith.constant 0 : index
    %c0_1 = arith.constant 0 : index
    %1 = vector.load %arg1[%c0_0, %c0_1] : memref<8x128xf32, #tpu.memory_space<vmem>>, vector<8x128xf32>
    %c0_2 = arith.constant 0 : index
    %c0_3 = arith.constant 0 : index
    %2 = vector.load %arg3[%c0_2, %c0_3] : memref<904x128xf32, #tpu.memory_space<vmem>>, vector<128x128xf32>
    %cst = arith.constant dense<0.000000e+00> : vector<8x128xf32>
    %3 = tpu.matmul %1, %2, %cst {dimension_numbers = #tpu.dot_dimension_numbers<[1], [0], [0], [1], [0, 0, 1, 1], [], []>} : vector<8x128xf32>, vector<128x128xf32>, vector<8x128xf32> -> vector<8x128xf32>
    %4 = vector.extract_strided_slice %0 {offsets = [0, 0], sizes = [1, 128], strides = [1, 1]} : vector<8x128xf32> to vector<1x128xf32>
    %5 = vector.broadcast %4 : vector<1x128xf32> to vector<8x128xf32>
    %6 = arith.addf %3, %5 : vector<8x128xf32>
    %cst_4 = arith.constant 0.000000e+00 : f32
    %7 = vector.broadcast %cst_4 : f32 to vector<8x128xf32>
    %8 = arith.maximumf %6, %7 : vector<8x128xf32>
    %c128 = arith.constant 128 : index
    %c0_5 = arith.constant 0 : index
    %9 = vector.load %arg3[%c128, %c0_5] : memref<904x128xf32, #tpu.memory_space<vmem>>, vector<128x128xf32>
    %cst_6 = arith.constant dense<0.000000e+00> : vector<8x128xf32>
    %10 = tpu.matmul %8, %9, %cst_6 {dimension_numbers = #tpu.dot_dimension_numbers<[1], [0], [0], [1], [0, 0, 1, 1], [], []>} : vector<8x128xf32>, vector<128x128xf32>, vector<8x128xf32> -> vector<8x128xf32>
    %11 = vector.extract_strided_slice %0 {offsets = [1, 0], sizes = [1, 128], strides = [1, 1]} : vector<8x128xf32> to vector<1x128xf32>
    %12 = vector.broadcast %11 : vector<1x128xf32> to vector<8x128xf32>
    %13 = arith.addf %10, %12 : vector<8x128xf32>
    %cst_7 = arith.constant 0.000000e+00 : f32
    %14 = vector.broadcast %cst_7 : f32 to vector<8x128xf32>
    %15 = arith.maximumf %13, %14 : vector<8x128xf32>
    %c256 = arith.constant 256 : index
    %c0_8 = arith.constant 0 : index
    %16 = vector.load %arg3[%c256, %c0_8] : memref<904x128xf32, #tpu.memory_space<vmem>>, vector<128x128xf32>
    %cst_9 = arith.constant dense<0.000000e+00> : vector<8x128xf32>
    %17 = tpu.matmul %15, %16, %cst_9 {dimension_numbers = #tpu.dot_dimension_numbers<[1], [0], [0], [1], [0, 0, 1, 1], [], []>} : vector<8x128xf32>, vector<128x128xf32>, vector<8x128xf32> -> vector<8x128xf32>
    %18 = vector.extract_strided_slice %0 {offsets = [2, 0], sizes = [1, 128], strides = [1, 1]} : vector<8x128xf32> to vector<1x128xf32>
    %19 = vector.broadcast %18 : vector<1x128xf32> to vector<8x128xf32>
    %20 = arith.addf %17, %19 : vector<8x128xf32>
    %c384 = arith.constant 384 : index
    %c0_10 = arith.constant 0 : index
    %21 = vector.load %arg3[%c384, %c0_10] : memref<904x128xf32, #tpu.memory_space<vmem>>, vector<128x128xf32>
    %cst_11 = arith.constant dense<0.000000e+00> : vector<8x128xf32>
    %22 = tpu.matmul %15, %21, %cst_11 {dimension_numbers = #tpu.dot_dimension_numbers<[1], [0], [0], [1], [0, 0, 1, 1], [], []>} : vector<8x128xf32>, vector<128x128xf32>, vector<8x128xf32> -> vector<8x128xf32>
    %23 = vector.extract_strided_slice %0 {offsets = [3, 0], sizes = [1, 128], strides = [1, 1]} : vector<8x128xf32> to vector<1x128xf32>
    %24 = vector.broadcast %23 : vector<1x128xf32> to vector<8x128xf32>
    %25 = arith.addf %22, %24 : vector<8x128xf32>
    %c0_12 = arith.constant 0 : index
    %c0_13 = arith.constant 0 : index
    %26 = vector.load %arg2[%c0_12, %c0_13] : memref<8x128xf32, #tpu.memory_space<vmem>>, vector<8x128xf32>
    %cst_14 = arith.constant 5.000000e-01 : f32
    %27 = vector.broadcast %cst_14 : f32 to vector<8x128xf32>
    %28 = arith.mulf %27, %25 : vector<8x128xf32>
    %29 = math.exp %28 : vector<8x128xf32>
    %30 = arith.mulf %29, %29 : vector<8x128xf32>
    %31 = arith.mulf %29, %26 : vector<8x128xf32>
    %32 = arith.addf %20, %31 : vector<8x128xf32>
    %33 = arith.mulf %32, %32 : vector<8x128xf32>
    %34 = arith.mulf %26, %26 : vector<8x128xf32>
    %35 = arith.subf %33, %34 : vector<8x128xf32>
    %cst_15 = arith.constant 5.000000e-01 : f32
    %36 = vector.broadcast %cst_15 : f32 to vector<8x128xf32>
    %37 = arith.mulf %36, %35 : vector<8x128xf32>
    %cst_16 = arith.constant 5.000000e-01 : f32
    %38 = vector.broadcast %cst_16 : f32 to vector<8x128xf32>
    %39 = arith.mulf %38, %25 : vector<8x128xf32>
    %40 = arith.subf %37, %39 : vector<8x128xf32>
    %cst_17 = arith.constant dense<0.000000e+00> : vector<8xf32>
    %41 = vector.multi_reduction <add>, %40, %cst_17 [1] : vector<8x128xf32> to vector<8xf32>
    %42 = vector.shape_cast %41 : vector<8xf32> to vector<8x1xf32>
    %cst_18 = arith.constant 1.000000e+00 : f32
    %43 = vector.broadcast %cst_18 : f32 to vector<8x128xf32>
    %44 = arith.addf %25, %43 : vector<8x128xf32>
    %45 = arith.mulf %20, %20 : vector<8x128xf32>
    %46 = arith.subf %44, %45 : vector<8x128xf32>
    %47 = arith.subf %46, %30 : vector<8x128xf32>
    %cst_19 = arith.constant dense<0.000000e+00> : vector<8xf32>
    %48 = vector.multi_reduction <add>, %47, %cst_19 [1] : vector<8x128xf32> to vector<8xf32>
    %49 = vector.shape_cast %48 : vector<8xf32> to vector<8x1xf32>
    %cst_20 = arith.constant 5.000000e-01 : f32
    %50 = vector.broadcast %cst_20 : f32 to vector<8x1xf32>
    %51 = arith.mulf %50, %49 : vector<8x1xf32>
    %c0_21 = arith.constant 0 : index
    %c0_22 = arith.constant 0 : index
    %52 = vector.load %arg5[%c0_21, %c0_22] : memref<8x2xf32, #tpu.memory_space<vmem>>, vector<8x1xf32>
    tpu.vector_store %arg5[%c0_21, %c0_22], %42 {strides = array<i32>} : memref<8x2xf32, #tpu.memory_space<vmem>>, vector<8x1xf32>,
    %c0_23 = arith.constant 0 : index
    %c1 = arith.constant 1 : index
    %53 = vector.load %arg5[%c0_23, %c1] : memref<8x2xf32, #tpu.memory_space<vmem>>, vector<8x1xf32>
    tpu.vector_store %arg5[%c0_23, %c1], %51 {strides = array<i32>} : memref<8x2xf32, #tpu.memory_space<vmem>>, vector<8x1xf32>,
    %c512 = arith.constant 512 : index
    %c0_24 = arith.constant 0 : index
    %54 = vector.load %arg3[%c512, %c0_24] : memref<904x128xf32, #tpu.memory_space<vmem>>, vector<128x128xf32>
    %cst_25 = arith.constant dense<0.000000e+00> : vector<8x128xf32>
    %55 = tpu.matmul %32, %54, %cst_25 {dimension_numbers = #tpu.dot_dimension_numbers<[1], [0], [0], [1], [0, 0, 1, 1], [], []>} : vector<8x128xf32>, vector<128x128xf32>, vector<8x128xf32> -> vector<8x128xf32>
    %56 = vector.extract_strided_slice %0 {offsets = [4, 0], sizes = [1, 128], strides = [1, 1]} : vector<8x128xf32> to vector<1x128xf32>
    %57 = vector.broadcast %56 : vector<1x128xf32> to vector<8x128xf32>
    %58 = arith.addf %55, %57 : vector<8x128xf32>
    %cst_26 = arith.constant 0.000000e+00 : f32
    %59 = vector.broadcast %cst_26 : f32 to vector<8x128xf32>
    %60 = arith.maximumf %58, %59 : vector<8x128xf32>
    %c640 = arith.constant 640 : index
    %c0_27 = arith.constant 0 : index
    %61 = vector.load %arg3[%c640, %c0_27] : memref<904x128xf32, #tpu.memory_space<vmem>>, vector<128x128xf32>
    %cst_28 = arith.constant dense<0.000000e+00> : vector<8x128xf32>
    %62 = tpu.matmul %60, %61, %cst_28 {dimension_numbers = #tpu.dot_dimension_numbers<[1], [0], [0], [1], [0, 0, 1, 1], [], []>} : vector<8x128xf32>, vector<128x128xf32>, vector<8x128xf32> -> vector<8x128xf32>
    %63 = vector.extract_strided_slice %0 {offsets = [5, 0], sizes = [1, 128], strides = [1, 1]} : vector<8x128xf32> to vector<1x128xf32>
    %64 = vector.broadcast %63 : vector<1x128xf32> to vector<8x128xf32>
    %65 = arith.addf %62, %64 : vector<8x128xf32>
    %cst_29 = arith.constant 0.000000e+00 : f32
    %66 = vector.broadcast %cst_29 : f32 to vector<8x128xf32>
    %67 = arith.maximumf %65, %66 : vector<8x128xf32>
    %c768 = arith.constant 768 : index
    %c0_30 = arith.constant 0 : index
    %68 = vector.load %arg3[%c768, %c0_30] : memref<904x128xf32, #tpu.memory_space<vmem>>, vector<128x128xf32>
    %cst_31 = arith.constant dense<0.000000e+00> : vector<8x128xf32>
    %69 = tpu.matmul %67, %68, %cst_31 {dimension_numbers = #tpu.dot_dimension_numbers<[1], [0], [0], [1], [0, 0, 1, 1], [], []>} : vector<8x128xf32>, vector<128x128xf32>, vector<8x128xf32> -> vector<8x128xf32>
    %70 = vector.extract_strided_slice %0 {offsets = [6, 0], sizes = [1, 128], strides = [1, 1]} : vector<8x128xf32> to vector<1x128xf32>
    %71 = vector.broadcast %70 : vector<1x128xf32> to vector<8x128xf32>
    %72 = arith.addf %69, %71 : vector<8x128xf32>
    %73 = arith.negf %72 : vector<8x128xf32>
    %74 = math.exp %73 : vector<8x128xf32>
    %cst_32 = arith.constant 1.000000e+00 : f32
    %75 = vector.broadcast %cst_32 : f32 to vector<8x128xf32>
    %76 = arith.addf %75, %74 : vector<8x128xf32>
    %77 = arith.divf %75, %76 : vector<8x128xf32>
    %c0_33 = arith.constant 0 : index
    %c0_34 = arith.constant 0 : index
    %78 = vector.load %arg4[%c0_33, %c0_34] : memref<8x128xf32, #tpu.memory_space<vmem>>, vector<8x128xf32>
    tpu.vector_store %arg4[%c0_33, %c0_34], %77 {strides = array<i32>} : memref<8x128xf32, #tpu.memory_space<vmem>>, vector<8x128xf32>,
    return
  }
  func.func @transform_0(%arg0: i32) -> (i32, i32) {
    %c0_i32 = arith.constant 0 : i32
    %c0_i32_0 = arith.constant 0 : i32
    return %arg0, %c0_i32 : i32, i32
  }
  func.func @transform_1(%arg0: i32) -> (i32, i32) {
    %c0_i32 = arith.constant 0 : i32
    %c0_i32_0 = arith.constant 0 : i32
    return %arg0, %c0_i32 : i32, i32
  }
  func.func @transform_2(%arg0: i32) -> (i32, i32) {
    %c0_i32 = arith.constant 0 : i32
    %c0_i32_0 = arith.constant 0 : i32
    %c0_i32_1 = arith.constant 0 : i32
    return %c0_i32, %c0_i32_0 : i32, i32
  }
  func.func @transform_3(%arg0: i32) -> (i32, i32) {
    %c0_i32 = arith.constant 0 : i32
    %c0_i32_0 = arith.constant 0 : i32
    return %arg0, %c0_i32 : i32, i32
  }
  func.func @transform_4(%arg0: i32) -> (i32, i32) {
    %c0_i32 = arith.constant 0 : i32
    %c0_i32_0 = arith.constant 0 : i32
    return %arg0, %c0_i32 : i32, i32
  }
}

</mosaic_0001>

<llo_original>
// kernel: tpu_custom_call.1
$region0: #{tpu_custom_call.1}
  #allocation0 [shape = 'u32[]', space=smem, size = 0x4, offset = 0x4, fixed_abs, tag = 'smem constant byte address 0x4 - core index']
  #allocation1 [shape = 'u32[72,128]{1,0:T(1,128)}', space=vmem, size = 0x9000, scoped, tag = 'internal scratch']
  %s0 = inlined_call_operand.hbm [shape: f32[8,128], index: 0, kind: input, shape index: {}]
  %s1 = inlined_call_operand.hbm [shape: f32[8,128], index: 1, kind: input, shape index: {}]
  %s2 = inlined_call_operand.hbm [shape: f32[904,128], index: 2, kind: input, shape index: {}]
  %s3 = inlined_call_operand.hbm [shape: f32[8,128], index: 3, kind: output, shape index: {0}]
  %s4 = inlined_call_operand.vmem [shape: f32[8,2], index: 4, kind: output, shape index: {1}]
  %5 = xla_tuple %s3, %s4
  %s6 = sld [smem:[#allocation0]]
  $region42: #{tpu_custom_call.1} parent=0
    _
  %s8 = ssub.s32 1, %s6
  %s9 = scalar_select 0, %s8, %s6
  $region1: #{tpu_custom_call.1} parent=0
    #allocation2 [shape = 'u8[4096]{0}', space=vmem, size = 0x1000, scoped, tag = 'input window, operand 0, single buffered']
    #allocation3 [shape = 's32[1]{0}', space=sflag, size = 0x4, scoped, tag = 'scoped memory for tpu_custom_call.1']
    #allocation4 [shape = 's32[1]{0}', space=sflag, size = 0x4, scoped, tag = 'scoped memory for tpu_custom_call.1']
    #allocation5 [shape = 'u8[4096]{0}', space=vmem, size = 0x1000, scoped, tag = 'input window, operand 1, single buffered']
    #allocation6 [shape = 's32[1]{0}', space=sflag, size = 0x4, scoped, tag = 'scoped memory for tpu_custom_call.1']
    #allocation7 [shape = 'u8[462848]{0}', space=vmem, size = 0x71000, scoped, tag = 'input window, operand 2, single buffered']
    #allocation8 [shape = 'u8[4096]{0}', space=vmem, size = 0x1000, scoped, tag = 'output window, operand 0, single buffered']
    %10 = vsyncpa [#allocation3], 0
    %11 = vsyncpa [#allocation6], 0
    %12 = vsyncpa [#allocation4], 0
    // Predicated region
    $region2: #{tpu_custom_call.1} parent=1 // pred_check
      _
    $region3: #{tpu_custom_call.1} parent=1 // pred_check_branch
      %14 = sbr.rel (0) target = $region5
    $region4: #{tpu_custom_call.1} parent=1 // pred_region
      %16 = vsyncadd [#allocation3], 0
      %s18 = sshll.u32 %s0, 4
      %s19 = int_to_ptr.hbm [resolvable:$true] %s18
      %s20 = sshll.u32 [#allocation2], 4
      %s21 = int_to_ptr.vmem [resolvable:$true] %s20
      %23 = dma.hbm_to_vmem [thread:$0]  %s19, 128, %s21, [#allocation3]
    $region5: #{tpu_custom_call.1} parent=1 // pred_fallthru
      _
    // Predicated region
    $region6: #{tpu_custom_call.1} parent=1 // pred_check
      _
    $region7: #{tpu_custom_call.1} parent=1 // pred_check_branch
      %25 = sbr.rel (0) target = $region9
    $region8: #{tpu_custom_call.1} parent=1 // pred_region
      %27 = vsyncadd [#allocation6], 0
      %s29 = sshll.u32 %s1, 4
      %s30 = int_to_ptr.hbm [resolvable:$true] %s29
      %s31 = sshll.u32 [#allocation5], 4
      %s32 = int_to_ptr.vmem [resolvable:$true] %s31
      %34 = dma.hbm_to_vmem [thread:$0]  %s30, 128, %s32, [#allocation6]
    $region9: #{tpu_custom_call.1} parent=1 // pred_fallthru
      _
    // Predicated region
    $region10: #{tpu_custom_call.1} parent=1 // pred_check
      _
    $region11: #{tpu_custom_call.1} parent=1 // pred_check_branch
      %36 = sbr.rel (0) target = $region13
    $region12: #{tpu_custom_call.1} parent=1 // pred_region
      %38 = vsyncadd [#allocation6], 0
      %s39 = sshll.u32 %s2, 4
      %s40 = int_to_ptr.hbm [resolvable:$true] %s39
      %s41 = sshll.u32 [#allocation7], 4
      %s42 = int_to_ptr.vmem [resolvable:$true] %s41
      %47 = dma.hbm_to_vmem [thread:$0]  %s40, 14464, %s42, [#allocation6], 128, 128, 8
    $region13: #{tpu_custom_call.1} parent=1 // pred_fallthru
      _
    // Predicated region
    $region14: #{tpu_custom_call.1} parent=1 // pred_check
      _
    $region15: #{tpu_custom_call.1} parent=1 // pred_check_branch
      %49 = sbr.rel (0) target = $region17
    $region16: #{tpu_custom_call.1} parent=1 // pred_region
      %51 = dma.done [#allocation3], 128
    $region17: #{tpu_custom_call.1} parent=1 // pred_fallthru
      _
    // Predicated region
    $region18: #{tpu_custom_call.1} parent=1 // pred_check
      _
    $region19: #{tpu_custom_call.1} parent=1 // pred_check_branch
      %53 = sbr.rel (0) target = $region21
    $region20: #{tpu_custom_call.1} parent=1 // pred_region
      %55 = dma.done [#allocation6], 128
    $region21: #{tpu_custom_call.1} parent=1 // pred_fallthru
      _
    // Predicated region
    $region22: #{tpu_custom_call.1} parent=1 // pred_check
      _
    $region23: #{tpu_custom_call.1} parent=1 // pred_check_branch
      %57 = sbr.rel (0) target = $region25
    $region24: #{tpu_custom_call.1} parent=1 // pred_region
      %59 = dma.done [#allocation6], 14464
    $region25: #{tpu_custom_call.1} parent=1 // pred_fallthru
      _
    %v60 = vld [vmem:[#allocation7 + $0x380] sm:$0xff]
    %v61 = vld [vmem:[#allocation2] sm:$0xff]
    %v62 = vld [vmem:[#allocation7] sm:$0xff]
    %v63 = vld [vmem:[#allocation7 + $0x8] sm:$0xff]
    %v64 = vld [vmem:[#allocation7 + $0x10] sm:$0xff]
    %v65 = vld [vmem:[#allocation7 + $0x18] sm:$0xff]
    %v66 = vld [vmem:[#allocation7 + $0x20] sm:$0xff]
    %v67 = vld [vmem:[#allocation7 + $0x28] sm:$0xff]
    %v68 = vld [vmem:[#allocation7 + $0x30] sm:$0xff]
    %v69 = vld [vmem:[#allocation7 + $0x38] sm:$0xff]
    %v70 = vld [vmem:[#allocation7 + $0x40] sm:$0xff]
    %v71 = vld [vmem:[#allocation7 + $0x48] sm:$0xff]
    %v72 = vld [vmem:[#allocation7 + $0x50] sm:$0xff]
    %v73 = vld [vmem:[#allocation7 + $0x58] sm:$0xff]
    %v74 = vld [vmem:[#allocation7 + $0x60] sm:$0xff]
    %v75 = vld [vmem:[#allocation7 + $0x68] sm:$0xff]
    %v76 = vld [vmem:[#allocation7 + $0x70] sm:$0xff]
    %v77 = vld [vmem:[#allocation7 + $0x78] sm:$0xff]
    %v78 = vperm.slane %v60, 0
    %79 = vmatpush.msra.mxu0 %v77
    %80 = vmatpush.msra.mxu0 %v76
    %81 = vmatpush.msra.mxu0 %v75
    %82 = vmatpush.msra.mxu0 %v74
    %83 = vmatpush.msra.mxu0 %v73
    %84 = vmatpush.msra.mxu0 %v72
    %85 = vmatpush.msra.mxu0 %v71
    %86 = vmatpush.msra.mxu0 %v70
    %87 = vmatpush.msra.mxu0 %v69
    %88 = vmatpush.msra.mxu0 %v68
    %89 = vmatpush.msra.mxu0 %v67
    %90 = vmatpush.msra.mxu0 %v66
    %91 = vmatpush.msra.mxu0 %v65
    %92 = vmatpush.msra.mxu0 %v64
    %93 = vmatpush.msra.mxu0 %v63
    %94 = vmatpush.msra.mxu0 %v62
    %95 = vmatmul.f32.gmra.mxu0 %v61
    %v96 = vpop.f32.mrf.mxu0
    %v97 = vadd.f32 %v78, %v96
    %98 = vdwg.mxu0
    %v99 = vmax.f32 %v97, 0.0
    %v100 = vld [vmem:[#allocation7 + $0x80] sm:$0xff]
    %v101 = vld [vmem:[#allocation7 + $0x88] sm:$0xff]
    %v102 = vld [vmem:[#allocation7 + $0x90] sm:$0xff]
    %v103 = vld [vmem:[#allocation7 + $0x98] sm:$0xff]
    %v104 = vld [vmem:[#allocation7 + $0xa0] sm:$0xff]
    %v105 = vld [vmem:[#allocation7 + $0xa8] sm:$0xff]
    %v106 = vld [vmem:[#allocation7 + $0xb0] sm:$0xff]
    %v107 = vld [vmem:[#allocation7 + $0xb8] sm:$0xff]
    %v108 = vld [vmem:[#allocation7 + $0xc0] sm:$0xff]
    %v109 = vld [vmem:[#allocation7 + $0xc8] sm:$0xff]
    %v110 = vld [vmem:[#allocation7 + $0xd0] sm:$0xff]
    %v111 = vld [vmem:[#allocation7 + $0xd8] sm:$0xff]
    %v112 = vld [vmem:[#allocation7 + $0xe0] sm:$0xff]
    %v113 = vld [vmem:[#allocation7 + $0xe8] sm:$0xff]
    %v114 = vld [vmem:[#allocation7 + $0xf0] sm:$0xff]
    %v115 = vld [vmem:[#allocation7 + $0xf8] sm:$0xff]
    %v116 = vperm.slane %v60, 1
    %117 = vmatpush.msra.mxu0 %v115
    %118 = vmatpush.msra.mxu0 %v114
    %119 = vmatpush.msra.mxu0 %v113
    %120 = vmatpush.msra.mxu0 %v112
    %121 = vmatpush.msra.mxu0 %v111
    %122 = vmatpush.msra.mxu0 %v110
    %123 = vmatpush.msra.mxu0 %v109
    %124 = vmatpush.msra.mxu0 %v108
    %125 = vmatpush.msra.mxu0 %v107
    %126 = vmatpush.msra.mxu0 %v106
    %127 = vmatpush.msra.mxu0 %v105
    %128 = vmatpush.msra.mxu0 %v104
    %129 = vmatpush.msra.mxu0 %v103
    %130 = vmatpush.msra.mxu0 %v102
    %131 = vmatpush.msra.mxu0 %v101
    %132 = vmatpush.msra.mxu0 %v100
    %133 = vmatmul.f32.gmra.mxu0 %v99
    %v134 = vpop.f32.mrf.mxu0
    %v135 = vadd.f32 %v116, %v134
    %136 = vdwg.mxu0
    %v137 = vmax.f32 %v135, 0.0
    %v138 = vld [vmem:[#allocation7 + $0x100] sm:$0xff]
    %v139 = vld [vmem:[#allocation7 + $0x108] sm:$0xff]
    %v140 = vld [vmem:[#allocation7 + $0x110] sm:$0xff]
    %v141 = vld [vmem:[#allocation7 + $0x118] sm:$0xff]
    %v142 = vld [vmem:[#allocation7 + $0x120] sm:$0xff]
    %v143 = vld [vmem:[#allocation7 + $0x128] sm:$0xff]
    %v144 = vld [vmem:[#allocation7 + $0x130] sm:$0xff]
    %v145 = vld [vmem:[#allocation7 + $0x138] sm:$0xff]
    %v146 = vld [vmem:[#allocation7 + $0x140] sm:$0xff]
    %v147 = vld [vmem:[#allocation7 + $0x148] sm:$0xff]
    %v148 = vld [vmem:[#allocation7 + $0x150] sm:$0xff]
    %v149 = vld [vmem:[#allocation7 + $0x158] sm:$0xff]
    %v150 = vld [vmem:[#allocation7 + $0x160] sm:$0xff]
    %v151 = vld [vmem:[#allocation7 + $0x168] sm:$0xff]
    %v152 = vld [vmem:[#allocation7 + $0x170] sm:$0xff]
    %v153 = vld [vmem:[#allocation7 + $0x178] sm:$0xff]
    %v154 = vperm.slane %v60, 2
    %155 = vmatpush.msra.mxu0 %v153
    %156 = vmatpush.msra.mxu0 %v152
    %157 = vmatpush.msra.mxu0 %v151
    %158 = vmatpush.msra.mxu0 %v150
    %159 = vmatpush.msra.mxu0 %v149
    %160 = vmatpush.msra.mxu0 %v148
    %161 = vmatpush.msra.mxu0 %v147
    %162 = vmatpush.msra.mxu0 %v146
    %163 = vmatpush.msra.mxu0 %v145
    %164 = vmatpush.msra.mxu0 %v144
    %165 = vmatpush.msra.mxu0 %v143
    %166 = vmatpush.msra.mxu0 %v142
    %167 = vmatpush.msra.mxu0 %v141
    %168 = vmatpush.msra.mxu0 %v140
    %169 = vmatpush.msra.mxu0 %v139
    %170 = vmatpush.msra.mxu0 %v138
    %171 = vmatmul.f32.gmra.mxu0 %v137
    %v172 = vpop.f32.mrf.mxu0
    %v173 = vadd.f32 %v154, %v172
    %174 = vdwg.mxu0
    %v175 = vld [vmem:[#allocation7 + $0x180] sm:$0xff]
    %v176 = vld [vmem:[#allocation7 + $0x188] sm:$0xff]
    %v177 = vld [vmem:[#allocation7 + $0x190] sm:$0xff]
    %v178 = vld [vmem:[#allocation7 + $0x198] sm:$0xff]
    %v179 = vld [vmem:[#allocation7 + $0x1a0] sm:$0xff]
    %v180 = vld [vmem:[#allocation7 + $0x1a8] sm:$0xff]
    %v181 = vld [vmem:[#allocation7 + $0x1b0] sm:$0xff]
    %v182 = vld [vmem:[#allocation7 + $0x1b8] sm:$0xff]
    %v183 = vld [vmem:[#allocation7 + $0x1c0] sm:$0xff]
    %v184 = vld [vmem:[#allocation7 + $0x1c8] sm:$0xff]
    %v185 = vld [vmem:[#allocation7 + $0x1d0] sm:$0xff]
    %v186 = vld [vmem:[#allocation7 + $0x1d8] sm:$0xff]
    %v187 = vld [vmem:[#allocation7 + $0x1e0] sm:$0xff]
    %v188 = vld [vmem:[#allocation7 + $0x1e8] sm:$0xff]
    %v189 = vld [vmem:[#allocation7 + $0x1f0] sm:$0xff]
    %v190 = vld [vmem:[#allocation7 + $0x1f8] sm:$0xff]
    %v191 = vperm.slane %v60, 3
    %192 = vmatpush.msra.mxu0 %v190
    %193 = vmatpush.msra.mxu0 %v189
    %194 = vmatpush.msra.mxu0 %v188
    %195 = vmatpush.msra.mxu0 %v187
    %196 = vmatpush.msra.mxu0 %v186
    %197 = vmatpush.msra.mxu0 %v185
    %198 = vmatpush.msra.mxu0 %v184
    %199 = vmatpush.msra.mxu0 %v183
    %200 = vmatpush.msra.mxu0 %v182
    %201 = vmatpush.msra.mxu0 %v181
    %202 = vmatpush.msra.mxu0 %v180
    %203 = vmatpush.msra.mxu0 %v179
    %204 = vmatpush.msra.mxu0 %v178
    %205 = vmatpush.msra.mxu0 %v177
    %206 = vmatpush.msra.mxu0 %v176
    %207 = vmatpush.msra.mxu0 %v175
    %208 = vmatmul.f32.gmra.mxu0 %v137
    %v209 = vpop.f32.mrf.mxu0
    %v210 = vadd.f32 %v191, %v209
    %211 = vdwg.mxu0
    %v212 = vld [vmem:[#allocation5] sm:$0xff]
    %v213 = vmul.f32 %v210, 0.5
    %v214 = vmul.f32 %v213, 1.442695
    %v215 = vpow.pop %v214
    %v216 = vmul.f32 %v215, %v215
    %v217 = vmul.f32 %v215, %v212
    %v218 = vadd.f32 %v173, %v217
    %v219 = vmul.f32 %v218, %v218
    %v220 = vmul.f32 %v212, %v212
    %v221 = vsub.f32 %v219, %v220
    %v222 = vmul.f32 %v221, 0.5
    %v223 = vsub.f32 %v222, %v213
    %224 = vadd.xlane.f32.xlu0 %v223
    %v225 = vpop.xlane.xlu0 %224
    %v226 = vadd.f32 %v210, 1.0
    %v227 = vmul.f32 %v173, %v173
    %v228 = vsub.f32 %v226, %v227
    %v229 = vsub.f32 %v228, %v216
    %230 = vadd.xlane.f32.xlu0 %v229
    %v231 = vpop.xlane.xlu0 %230
    %v232 = vmul.f32 %v231, 0.5
    %vm233 = vcmask 7168
    %234 = vst.msk [vmem:[%s4] sm:$0xff] %vm233, %v225
    %vm235 = vcmask 15368
    %236 = vst.msk [vmem:[%s4] sm:$0xff] %vm235, %v232
    %v237 = vld [vmem:[#allocation7 + $0x200] sm:$0xff]
    %v238 = vld [vmem:[#allocation7 + $0x208] sm:$0xff]
    %v239 = vld [vmem:[#allocation7 + $0x210] sm:$0xff]
    %v240 = vld [vmem:[#allocation7 + $0x218] sm:$0xff]
    %v241 = vld [vmem:[#allocation7 + $0x220] sm:$0xff]
    %v242 = vld [vmem:[#allocation7 + $0x228] sm:$0xff]
    %v243 = vld [vmem:[#allocation7 + $0x230] sm:$0xff]
    %v244 = vld [vmem:[#allocation7 + $0x238] sm:$0xff]
    %v245 = vld [vmem:[#allocation7 + $0x240] sm:$0xff]
    %v246 = vld [vmem:[#allocation7 + $0x248] sm:$0xff]
    %v247 = vld [vmem:[#allocation7 + $0x250] sm:$0xff]
    %v248 = vld [vmem:[#allocation7 + $0x258] sm:$0xff]
    %v249 = vld [vmem:[#allocation7 + $0x260] sm:$0xff]
    %v250 = vld [vmem:[#allocation7 + $0x268] sm:$0xff]
    %v251 = vld [vmem:[#allocation7 + $0x270] sm:$0xff]
    %v252 = vld [vmem:[#allocation7 + $0x278] sm:$0xff]
    %v253 = vperm.slane %v60, 4
    %254 = vmatpush.msra.mxu0 %v252
    %255 = vmatpush.msra.mxu0 %v251
    %256 = vmatpush.msra.mxu0 %v250
    %257 = vmatpush.msra.mxu0 %v249
    %258 = vmatpush.msra.mxu0 %v248
    %259 = vmatpush.msra.mxu0 %v247
    %260 = vmatpush.msra.mxu0 %v246
    %261 = vmatpush.msra.mxu0 %v245
    %262 = vmatpush.msra.mxu0 %v244
    %263 = vmatpush.msra.mxu0 %v243
    %264 = vmatpush.msra.mxu0 %v242
    %265 = vmatpush.msra.mxu0 %v241
    %266 = vmatpush.msra.mxu0 %v240
    %267 = vmatpush.msra.mxu0 %v239
    %268 = vmatpush.msra.mxu0 %v238
    %269 = vmatpush.msra.mxu0 %v237
    %270 = vmatmul.f32.gmra.mxu0 %v218
    %v271 = vpop.f32.mrf.mxu0
    %v272 = vadd.f32 %v253, %v271
    %273 = vdwg.mxu0
    %v274 = vmax.f32 %v272, 0.0
    %v275 = vld [vmem:[#allocation7 + $0x280] sm:$0xff]
    %v276 = vld [vmem:[#allocation7 + $0x288] sm:$0xff]
    %v277 = vld [vmem:[#allocation7 + $0x290] sm:$0xff]
    %v278 = vld [vmem:[#allocation7 + $0x298] sm:$0xff]
    %v279 = vld [vmem:[#allocation7 + $0x2a0] sm:$0xff]
    %v280 = vld [vmem:[#allocation7 + $0x2a8] sm:$0xff]
    %v281 = vld [vmem:[#allocation7 + $0x2b0] sm:$0xff]
    %v282 = vld [vmem:[#allocation7 + $0x2b8] sm:$0xff]
    %v283 = vld [vmem:[#allocation7 + $0x2c0] sm:$0xff]
    %v284 = vld [vmem:[#allocation7 + $0x2c8] sm:$0xff]
    %v285 = vld [vmem:[#allocation7 + $0x2d0] sm:$0xff]
    %v286 = vld [vmem:[#allocation7 + $0x2d8] sm:$0xff]
    %v287 = vld [vmem:[#allocation7 + $0x2e0] sm:$0xff]
    %v288 = vld [vmem:[#allocation7 + $0x2e8] sm:$0xff]
    %v289 = vld [vmem:[#allocation7 + $0x2f0] sm:$0xff]
    %v290 = vld [vmem:[#allocation7 + $0x2f8] sm:$0xff]
    %v291 = vperm.slane %v60, 5
    %292 = vmatpush.msra.mxu0 %v290
    %293 = vmatpush.msra.mxu0 %v289
    %294 = vmatpush.msra.mxu0 %v288
    %295 = vmatpush.msra.mxu0 %v287
    %296 = vmatpush.msra.mxu0 %v286
    %297 = vmatpush.msra.mxu0 %v285
    %298 = vmatpush.msra.mxu0 %v284
    %299 = vmatpush.msra.mxu0 %v283
    %300 = vmatpush.msra.mxu0 %v282
    %301 = vmatpush.msra.mxu0 %v281
    %302 = vmatpush.msra.mxu0 %v280
    %303 = vmatpush.msra.mxu0 %v279
    %304 = vmatpush.msra.mxu0 %v278
    %305 = vmatpush.msra.mxu0 %v277
    %306 = vmatpush.msra.mxu0 %v276
    %307 = vmatpush.msra.mxu0 %v275
    %308 = vmatmul.f32.gmra.mxu0 %v274
    %v309 = vpop.f32.mrf.mxu0
    %v310 = vadd.f32 %v291, %v309
    %311 = vdwg.mxu0
    %v312 = vmax.f32 %v310, 0.0
    %v313 = vld [vmem:[#allocation7 + $0x300] sm:$0xff]
    %v314 = vld [vmem:[#allocation7 + $0x308] sm:$0xff]
    %v315 = vld [vmem:[#allocation7 + $0x310] sm:$0xff]
    %v316 = vld [vmem:[#allocation7 + $0x318] sm:$0xff]
    %v317 = vld [vmem:[#allocation7 + $0x320] sm:$0xff]
    %v318 = vld [vmem:[#allocation7 + $0x328] sm:$0xff]
    %v319 = vld [vmem:[#allocation7 + $0x330] sm:$0xff]
    %v320 = vld [vmem:[#allocation7 + $0x338] sm:$0xff]
    %v321 = vld [vmem:[#allocation7 + $0x340] sm:$0xff]
    %v322 = vld [vmem:[#allocation7 + $0x348] sm:$0xff]
    %v323 = vld [vmem:[#allocation7 + $0x350] sm:$0xff]
    %v324 = vld [vmem:[#allocation7 + $0x358] sm:$0xff]
    %v325 = vld [vmem:[#allocation7 + $0x360] sm:$0xff]
    %v326 = vld [vmem:[#allocation7 + $0x368] sm:$0xff]
    %v327 = vld [vmem:[#allocation7 + $0x370] sm:$0xff]
    %v328 = vld [vmem:[#allocation7 + $0x378] sm:$0xff]
    %v329 = vperm.slane %v60, 6
    %330 = vmatpush.msra.mxu0 %v328
    %331 = vmatpush.msra.mxu0 %v327
    %332 = vmatpush.msra.mxu0 %v326
    %333 = vmatpush.msra.mxu0 %v325
    %334 = vmatpush.msra.mxu0 %v324
    %335 = vmatpush.msra.mxu0 %v323
    %336 = vmatpush.msra.mxu0 %v322
    %337 = vmatpush.msra.mxu0 %v321
    %338 = vmatpush.msra.mxu0 %v320
    %339 = vmatpush.msra.mxu0 %v319
    %340 = vmatpush.msra.mxu0 %v318
    %341 = vmatpush.msra.mxu0 %v317
    %342 = vmatpush.msra.mxu0 %v316
    %343 = vmatpush.msra.mxu0 %v315
    %344 = vmatpush.msra.mxu0 %v314
    %345 = vmatpush.msra.mxu0 %v313
    %346 = vmatmul.f32.gmra.mxu0 %v312
    %v347 = vpop.f32.mrf.mxu0
    %v348 = vadd.f32 %v329, %v347
    %349 = vdwg.mxu0
    %v350 = vxor.u32 %v348, 2147483648
    %v351 = vmul.f32 %v350, 1.442695
    %v352 = vpow.pop %v351
    %v353 = vadd.f32 %v352, 1.0
    %v354 = vrcp.pop %v353
    %v355 = vmul.f32 %v353, %v354
    %v356 = vsub.f32 1.0, %v355
    %v357 = vmul.f32 %v354, %v356
    %v358 = vadd.f32 %v354, %v357
    %vm359 = vweird.f32 %v353
    %vm360 = vweird.f32 %v354
    %vm361 = vmor %vm359, %vm360
    %v362 = vsel %vm361, %v354, %v358
    %v363 = vand.u32 2147483647, %v353
    %vm364 = vcmp.eq.f32.partialorder %v363, 8.507059e+37
    %v365 = vand.u32 %v353, 2147483648
    %v366 = vor.u32 1.1754944e-38, %v365
    %v367 = vsel %vm364, %v366, %v362
    %v368 = vmul.f32 1.0, %v367
    %369 = vst [vmem:[#allocation8] sm:$0xff] %v368
    // Predicated region
    $region26: #{tpu_custom_call.1} parent=1 // pred_check
      _
    $region27: #{tpu_custom_call.1} parent=1 // pred_check_branch
      %371 = sbr.rel (0) target = $region29
    $region28: #{tpu_custom_call.1} parent=1 // pred_region
      %373 = vsyncadd [#allocation4], 0
      %s375 = sshll.u32 [#allocation8], 4
      %s376 = int_to_ptr.vmem [resolvable:$true] %s375
      %s377 = sshll.u32 %s3, 4
      %s378 = int_to_ptr.hbm [resolvable:$true] %s377
      %380 = dma.vmem_to_hbm [thread:$0]  %s376, 128, %s378, [#allocation4]
    $region29: #{tpu_custom_call.1} parent=1 // pred_fallthru
      _
    // Predicated region
    $region30: #{tpu_custom_call.1} parent=1 // pred_check
      _
    $region31: #{tpu_custom_call.1} parent=1 // pred_check_branch
      %382 = sbr.rel (0) target = $region33
    $region32: #{tpu_custom_call.1} parent=1 // pred_region
      _
    $region33: #{tpu_custom_call.1} parent=1 // pred_fallthru
      _
    // Predicated region
    $region34: #{tpu_custom_call.1} parent=1 // pred_check
      _
    $region35: #{tpu_custom_call.1} parent=1 // pred_check_branch
      %384 = sbr.rel (0) target = $region37
    $region36: #{tpu_custom_call.1} parent=1 // pred_region
      %386 = dma.done [#allocation4], 128
    $region37: #{tpu_custom_call.1} parent=1 // pred_fallthru
      _
    // Predicated region
    $region38: #{tpu_custom_call.1} parent=1 // pred_check
      _
    $region39: #{tpu_custom_call.1} parent=1 // pred_check_branch
      %388 = sbr.rel (0) target = $region41
    $region40: #{tpu_custom_call.1} parent=1 // pred_region
      _
    $region41: #{tpu_custom_call.1} parent=1 // pred_fallthru
      _
    %389 = vsyncpa [#allocation3], 1
    %390 = vsyncpa [#allocation6], 1
    %391 = vsyncpa [#allocation4], 1

</llo_original>
